<compile_context>
chip_gen: v7x
topology: tpu7x:2x2x1
jax: 0.10.0
libtpu: 0.0.40
codegen_flags: <defaults>
</compile_context>

<pallas_src>
import functools

import jax
import jax.numpy as jnp
from jax.experimental import pallas as pl
from jax.experimental.pallas import tpu as pltpu


def _round_up(x, m):
    return ((x + m - 1) // m) * m


def _cdiv(a, b):
    return -(-a // b)


# --------------------------------------------------------------------------
# Per-generation configuration (best effort, conservative fallbacks).
# --------------------------------------------------------------------------
@functools.lru_cache(maxsize=1)
def _tpu_config():
    """Returns (vmem_capacity_bytes, lane_align, num_tensorcores)."""
    kind = ""
    try:
        kind = jax.devices()[0].device_kind.lower()
    except Exception:
        pass
    if "v7" in kind or "7x" in kind:
        gen = 7
    elif "v6" in kind:
        gen = 6
    elif "v5" in kind:
        gen = 5
    elif "v4" in kind:
        gen = 4
    else:
        gen = 0

    vmem_cap = None
    try:
        vmem_cap = getattr(pltpu.get_tpu_info(), "vmem_capacity_bytes", None)
    except Exception:
        pass
    if vmem_cap is None:
        # v5e / v6e: 128 MiB per TC; v7x: 64 MiB per TC; unknown: stay safe.
        vmem_cap = {5: 128 << 20, 6: 128 << 20, 7: 64 << 20}.get(gen, 32 << 20)

    lane_align = 256 if gen >= 6 else 128   # v6e/v7x MXU passes are 256x256
    num_cores = 2 if gen >= 7 else 1        # v7x: 2 TensorCores per chip
    return int(vmem_cap), lane_align, num_cores


# --------------------------------------------------------------------------
# Kernel: fused fc1 -> ReLU -> fc2 on one (batch tile, hidden chunk) step.
# Grid = (batch_tiles, hidden_chunks); hidden axis is the reduction.
# --------------------------------------------------------------------------
def _mlp_kernel(x_ref, w1t_ref, w2t_ref, o_ref, acc_ref):
    k = pl.program_id(1)

    @pl.when(k == 0)
    def _():
        acc_ref[...] = jnp.zeros_like(acc_ref)

    # fc1 on the MXU with f32 accumulation; ReLU in f32 on the VPU.
    h = jnp.dot(x_ref[...], w1t_ref[...], preferred_element_type=jnp.float32)
    h = jnp.maximum(h, 0.0)
    # fc2: cast activations to the weight dtype for the MXU, accumulate in f32.
    acc_ref[...] += jnp.dot(h.astype(w2t_ref.dtype), w2t_ref[...],
                            preferred_element_type=jnp.float32)

    @pl.when(k == pl.num_programs(1) - 1)
    def _():
        o_ref[...] = acc_ref[...].astype(o_ref.dtype)


# --------------------------------------------------------------------------
# One-time parameter preparation (hoisted out of the forward path).
# --------------------------------------------------------------------------
def prepare_params(w1, w2, *, compute_dtype=jnp.bfloat16, lane_align=None):
    """Transpose + lane-pad the PyTorch-layout weights once.

    w1: [hidden_dim, input_dim]   (nn.Linear.weight layout)
    w2: [output_dim, hidden_dim]

    Zero-padding is exact: padded hidden columns give h==0 -> relu 0 ->
    contribute nothing; padded output columns are sliced off after the kernel.
    bf16 compute is the default (f32 MXU accumulation is kept in-kernel);
    pass compute_dtype=jnp.float32 for bit-faithful f32 compute.
    """
    hidden_dim, in_dim = w1.shape
    out_dim, hidden_dim2 = w2.shape
    assert hidden_dim == hidden_dim2

    if lane_align is None:
        _, lane_align, _ = _tpu_config()

    hidden_p = _round_up(hidden_dim, lane_align)
    out_p = _round_up(out_dim, lane_align)

    w1t = jnp.pad(w1.T, ((0, 0), (0, hidden_p - hidden_dim)))   # [in, hidden_p]
    w2t = jnp.pad(w2.T, ((0, hidden_p - hidden_dim), (0, out_p - out_dim)))
    if compute_dtype is not None:
        w1t = w1t.astype(compute_dtype)
        w2t = w2t.astype(compute_dtype)

    return {"w1t": w1t, "w2t": w2t, "out_dim": out_dim}


# --------------------------------------------------------------------------
# Forward pass.
# --------------------------------------------------------------------------
def predictor_forward(x, params, *, tb_target=256):
    """
    x:      [B, input_dim]
    params: output of prepare_params(w1, w2)
    returns [B, output_dim] in x's original dtype
    """
    w1t, w2t, out_dim = params["w1t"], params["w2t"], params["out_dim"]
    B, in_dim = x.shape
    in_dim_w, hidden_p = w1t.shape
    assert in_dim == in_dim_w, "input feature dim mismatch"
    _, out_p = w2t.shape

    vmem_cap, lane_align, num_cores = _tpu_config()
    budget = int(0.70 * vmem_cap)       # design target for our VMEM estimate
    vmem_limit = int(0.90 * vmem_cap)   # compile-time limit (headroom vs estimate)

    out_dtype = x.dtype                 # module semantics: f32 in -> f32 out
    if x.dtype != w1t.dtype:
        x = x.astype(w1t.dtype)         # one-time cast to the MXU compute dtype
    itemsize = jnp.dtype(x.dtype).itemsize
    w_itemsize = jnp.dtype(w1t.dtype).itemsize
    out_itemsize = jnp.dtype(out_dtype).itemsize

    # --- batch tile: near-divisor of B (minimal padding); >=2 blocks on v7x --
    row_align = 16 if itemsize == 2 else 8       # dense sublane packing
    nb = max(1, _cdiv(B, max(tb_target, lane_align)))
    if num_cores >= 2 and B >= num_cores * row_align:
        nb = max(nb, num_cores)                  # both v7x TensorCores get work
    tb = _round_up(_cdiv(B, nb), row_align)

    # --- hidden-dim tiling: keep tb, bound weight residency ------------------
    def vmem_estimate(tb_, th_):
        x_bytes = 2 * tb_ * in_dim * itemsize                     # double-buffered
        w_bytes = 2 * (in_dim * th_ + th_ * out_p) * w_itemsize   # conservative
        o_bytes = 2 * tb_ * out_p * out_itemsize
        acc_bytes = tb_ * out_p * 4
        inter = tb_ * th_ * (4 + w_itemsize)  # f32 h + its cast for 2nd matmul
        fudge = 2 << 20                       # Mosaic matmul internal scratch
        return x_bytes + w_bytes + o_bytes + acc_bytes + inter + fudge

    while True:
        nk = 1
        while True:
            th = _round_up(_cdiv(hidden_p, nk), lane_align)
            if vmem_estimate(tb, th) <= budget or th <= lane_align:
                break
            nk *= 2
        if vmem_estimate(tb, th) <= budget or tb <= row_align:
            break
        nb *= 2                                  # pathological in_dim/out_p case
        tb = _round_up(_cdiv(B, nb), row_align)
    nk = _cdiv(hidden_p, th)
    hidden_pp = nk * th
    # TODO(synk): if a single (in_dim, lane_align)/(lane_align, out_p) weight
    # chunk still overflows VMEM, add in_dim / out_p grid axes as well.

    if hidden_pp > hidden_p:   # pad an extra zero hidden chunk (exact, rare)
        w1t = jnp.pad(w1t, ((0, 0), (0, hidden_pp - hidden_p)))
        w2t = jnp.pad(w2t, ((0, hidden_pp - hidden_p), (0, 0)))

    B_p = nb * tb
    if B_p != B:
        x = jnp.pad(x, ((0, B_p - B), (0, 0)))

    flops = 2 * B_p * (in_dim * hidden_pp + hidden_pp * out_p)
    bytes_accessed = (B_p * in_dim * itemsize
                      + (in_dim * hidden_pp + hidden_pp * out_p) * w_itemsize
                      + B_p * out_p * out_itemsize)

    def run(single_buffer_weights):
        w_kwargs = {}
        if single_buffer_weights and hasattr(pl, "Buffered"):
            # Weight blocks never change across the grid -> one buffer is enough.
            w_kwargs = dict(pipeline_mode=pl.Buffered(1))
        return pl.pallas_call(
            _mlp_kernel,
            out_shape=jax.ShapeDtypeStruct((B_p, out_p), out_dtype),
            grid_spec=pltpu.PrefetchScalarGridSpec(
                num_scalar_prefetch=0,
                grid=(nb, nk),
                in_specs=[
                    pl.BlockSpec((tb, in_dim), lambda i, k: (i, 0)),
                    pl.BlockSpec((in_dim, th), lambda i, k: (0, k), **w_kwargs),
                    pl.BlockSpec((th, out_p), lambda i, k: (k, 0), **w_kwargs),
                ],
                out_specs=pl.BlockSpec((tb, out_p), lambda i, k: (i, 0)),
                scratch_shapes=[pltpu.VMEM((tb, out_p), jnp.float32)],
            ),
            compiler_params=pltpu.CompilerParams(
                dimension_semantics=("parallel", "arbitrary"),
                vmem_limit_bytes=vmem_limit,
            ),
            cost_estimate=pl.CostEstimate(
                flops=flops, transcendentals=0, bytes_accessed=bytes_accessed),
        )(x, w1t, w2t)

    if nk == 1:
        try:
            y_p = run(True)
        except Exception:
            y_p = run(False)   # JAX version without pipeline_mode / Buffered(1)
    else:
        y_p = run(False)       # weights change per step -> keep double-buffering

    # Strip batch and output-feature padding.
    return y_p[:B, :out_dim]


# --------------------------------------------------------------------------
# Reference + self-test
# --------------------------------------------------------------------------
def _reference(x, w1, w2):
    h = jnp.maximum(x @ w1.T, 0.0)
    return h @ w2.T


if __name__ == "__main__":
    # Small shapes consistent with the module's forward.
    batch = 8
    input_dim = 32
    hidden_dim = 64
    output_dim = 16

    key = jax.random.PRNGKey(0)
    kx, k1, k2 = jax.random.split(key, 3)

    x = jax.random.normal(kx, (batch, input_dim), dtype=jnp.float32)
    # Deterministic parameter init (stand-in for nn.Linear's kaiming-uniform).
    w1 = jax.random.normal(k1, (hidden_dim, input_dim), dtype=jnp.float32) * 0.1
    w2 = jax.random.normal(k2, (output_dim, hidden_dim), dtype=jnp.float32) * 0.1

    y_ref = _reference(x, w1, w2)

    # f32 compute path: exact vs the f32 reference.
    params_f32 = prepare_params(w1, w2, compute_dtype=jnp.float32)
    y32 = jax.block_until_ready(predictor_forward(x, params_f32))
    assert y32.shape == (batch, output_dim)
    assert y32.dtype == x.dtype
    assert jnp.allclose(y32, y_ref, atol=1e-5, rtol=1e-5), "f32 mismatch vs reference"

    # Default bf16-MXU path (f32 accumulation): loose tolerance vs f32 reference.
    params = prepare_params(w1, w2)
    y = jax.block_until_ready(predictor_forward(x, params))
    assert y.shape == (batch, output_dim)
    assert jnp.allclose(y, y_ref, atol=5e-2, rtol=5e-2), "bf16 mismatch vs reference"

    print("KERNEL_OK")
</pallas_src>

<mosaic_0001>
module attributes {stable_mosaic.version = 11 : i64} {
  func.func @_mlp_kernel(%arg0: i32, %arg1: i32, %arg2: memref<8x32xf32, #tpu.memory_space<vmem>>, %arg3: memref<32x128xf32, #tpu.memory_space<vmem>>, %arg4: memref<128x128xf32, #tpu.memory_space<vmem>>, %arg5: memref<8x128xf32, #tpu.memory_space<vmem>>, %arg6: memref<8x128xf32, #tpu.memory_space<vmem>>) attributes {dimension_semantics = [#tpu.dimension_semantics<parallel>, #tpu.dimension_semantics<arbitrary>], iteration_bounds = array<i64: 1, 1>, scalar_prefetch = 0 : i64, scratch_operands = 1 : i64, tpu.core_type = #tpu.core_type<tc>, window_params = [{transform_indices = @transform_0, window_bounds = array<i64: 8, 32>}, {pipeline_mode = #tpu.pipeline_mode<synchronous>, transform_indices = @transform_1, window_bounds = array<i64: 32, 128>}, {pipeline_mode = #tpu.pipeline_mode<synchronous>, transform_indices = @transform_2, window_bounds = array<i64: 128, 128>}, {transform_indices = @transform_3, window_bounds = array<i64: 8, 128>}]} {
    %c0_i32 = arith.constant 0 : i32
    %0 = arith.cmpi eq, %arg1, %c0_i32 : i32
    %1 = arith.extui %0 : i1 to i32
    %c0_i32_0 = arith.constant 0 : i32
    %2 = arith.cmpi ne, %1, %c0_i32_0 : i32
    scf.if %2 {
      %cst_14 = arith.constant 0.000000e+00 : f32
      %16 = vector.broadcast %cst_14 : f32 to vector<8x128xf32>
      %c0_15 = arith.constant 0 : index
      %c0_16 = arith.constant 0 : index
      %17 = vector.load %arg6[%c0_15, %c0_16] : memref<8x128xf32, #tpu.memory_space<vmem>>, vector<8x128xf32>
      tpu.vector_store %arg6[%c0_15, %c0_16], %16 {strides = array<i32>} : memref<8x128xf32, #tpu.memory_space<vmem>>, vector<8x128xf32>,
    } else {
    }
    %c0 = arith.constant 0 : index
    %c0_1 = arith.constant 0 : index
    %3 = vector.load %arg2[%c0, %c0_1] : memref<8x32xf32, #tpu.memory_space<vmem>>, vector<8x32xf32>
    %c0_2 = arith.constant 0 : index
    %c0_3 = arith.constant 0 : index
    %4 = vector.load %arg3[%c0_2, %c0_3] : memref<32x128xf32, #tpu.memory_space<vmem>>, vector<32x128xf32>
    %cst = arith.constant dense<0.000000e+00> : vector<8x128xf32>
    %5 = tpu.matmul %3, %4, %cst {dimension_numbers = #tpu.dot_dimension_numbers<[1], [0], [0], [1], [0, 0, 1, 1], [], []>} : vector<8x32xf32>, vector<32x128xf32>, vector<8x128xf32> -> vector<8x128xf32>
    %cst_4 = arith.constant 0.000000e+00 : f32
    %6 = vector.broadcast %cst_4 : f32 to vector<8x128xf32>
    %7 = arith.maximumf %5, %6 : vector<8x128xf32>
    %c0_5 = arith.constant 0 : index
    %c0_6 = arith.constant 0 : index
    %8 = vector.load %arg6[%c0_5, %c0_6] : memref<8x128xf32, #tpu.memory_space<vmem>>, vector<8x128xf32>
    %c0_7 = arith.constant 0 : index
    %c0_8 = arith.constant 0 : index
    %9 = vector.load %arg4[%c0_7, %c0_8] : memref<128x128xf32, #tpu.memory_space<vmem>>, vector<128x128xf32>
    %cst_9 = arith.constant dense<0.000000e+00> : vector<8x128xf32>
    %10 = tpu.matmul %7, %9, %cst_9 {dimension_numbers = #tpu.dot_dimension_numbers<[1], [0], [0], [1], [0, 0, 1, 1], [], []>} : vector<8x128xf32>, vector<128x128xf32>, vector<8x128xf32> -> vector<8x128xf32>
    %11 = arith.addf %8, %10 : vector<8x128xf32>
    %c0_10 = arith.constant 0 : index
    %c0_11 = arith.constant 0 : index
    %12 = vector.load %arg6[%c0_10, %c0_11] : memref<8x128xf32, #tpu.memory_space<vmem>>, vector<8x128xf32>
    tpu.vector_store %arg6[%c0_10, %c0_11], %11 {strides = array<i32>} : memref<8x128xf32, #tpu.memory_space<vmem>>, vector<8x128xf32>,
    %c0_i32_12 = arith.constant 0 : i32
    %13 = arith.cmpi eq, %arg1, %c0_i32_12 : i32
    %14 = arith.extui %13 : i1 to i32
    %c0_i32_13 = arith.constant 0 : i32
    %15 = arith.cmpi ne, %14, %c0_i32_13 : i32
    scf.if %15 {
      %c0_14 = arith.constant 0 : index
      %c0_15 = arith.constant 0 : index
      %16 = vector.load %arg6[%c0_14, %c0_15] : memref<8x128xf32, #tpu.memory_space<vmem>>, vector<8x128xf32>
      %c0_16 = arith.constant 0 : index
      %c0_17 = arith.constant 0 : index
      %17 = vector.load %arg5[%c0_16, %c0_17] : memref<8x128xf32, #tpu.memory_space<vmem>>, vector<8x128xf32>
      tpu.vector_store %arg5[%c0_16, %c0_17], %16 {strides = array<i32>} : memref<8x128xf32, #tpu.memory_space<vmem>>, vector<8x128xf32>,
    } else {
    }
    return
  }
  func.func @transform_0(%arg0: i32, %arg1: i32) -> (i32, i32) {
    %c0_i32 = arith.constant 0 : i32
    %c0_i32_0 = arith.constant 0 : i32
    return %arg0, %c0_i32 : i32, i32
  }
  func.func @transform_1(%arg0: i32, %arg1: i32) -> (i32, i32) {
    %c0_i32 = arith.constant 0 : i32
    %c0_i32_0 = arith.constant 0 : i32
    return %c0_i32, %arg1 : i32, i32
  }
  func.func @transform_2(%arg0: i32, %arg1: i32) -> (i32, i32) {
    %c0_i32 = arith.constant 0 : i32
    %c0_i32_0 = arith.constant 0 : i32
    return %arg1, %c0_i32 : i32, i32
  }
  func.func @transform_3(%arg0: i32, %arg1: i32) -> (i32, i32) {
    %c0_i32 = arith.constant 0 : i32
    %c0_i32_0 = arith.constant 0 : i32
    return %arg0, %c0_i32 : i32, i32
  }
}

module attributes {stable_mosaic.version = 11 : i64} {
  func.func @_mlp_kernel(%arg0: i32, %arg1: i32, %arg2: memref<8x32xf32, #tpu.memory_space<vmem>>, %arg3: memref<32x128xf32, #tpu.memory_space<vmem>>, %arg4: memref<128x128xf32, #tpu.memory_space<vmem>>, %arg5: memref<8x128xf32, #tpu.memory_space<vmem>>, %arg6: memref<8x128xf32, #tpu.memory_space<vmem>>) attributes {dimension_semantics = [#tpu.dimension_semantics<parallel>, #tpu.dimension_semantics<arbitrary>], iteration_bounds = array<i64: 1, 1>, scalar_prefetch = 0 : i64, scratch_operands = 1 : i64, tpu.core_type = #tpu.core_type<tc>, window_params = [{transform_indices = @transform_0, window_bounds = array<i64: 8, 32>}, {transform_indices = @transform_1, window_bounds = array<i64: 32, 128>}, {transform_indices = @transform_2, window_bounds = array<i64: 128, 128>}, {transform_indices = @transform_3, window_bounds = array<i64: 8, 128>}]} {
    %c0_i32 = arith.constant 0 : i32
    %0 = arith.cmpi eq, %arg1, %c0_i32 : i32
    %1 = arith.extui %0 : i1 to i32
    %c0_i32_0 = arith.constant 0 : i32
    %2 = arith.cmpi ne, %1, %c0_i32_0 : i32
    scf.if %2 {
      %cst_14 = arith.constant 0.000000e+00 : f32
      %16 = vector.broadcast %cst_14 : f32 to vector<8x128xf32>
      %c0_15 = arith.constant 0 : index
      %c0_16 = arith.constant 0 : index
      %17 = vector.load %arg6[%c0_15, %c0_16] : memref<8x128xf32, #tpu.memory_space<vmem>>, vector<8x128xf32>
      tpu.vector_store %arg6[%c0_15, %c0_16], %16 {strides = array<i32>} : memref<8x128xf32, #tpu.memory_space<vmem>>, vector<8x128xf32>,
    } else {
    }
    %c0 = arith.constant 0 : index
    %c0_1 = arith.constant 0 : index
    %3 = vector.load %arg2[%c0, %c0_1] : memref<8x32xf32, #tpu.memory_space<vmem>>, vector<8x32xf32>
    %c0_2 = arith.constant 0 : index
    %c0_3 = arith.constant 0 : index
    %4 = vector.load %arg3[%c0_2, %c0_3] : memref<32x128xf32, #tpu.memory_space<vmem>>, vector<32x128xf32>
    %cst = arith.constant dense<0.000000e+00> : vector<8x128xf32>
    %5 = tpu.matmul %3, %4, %cst {dimension_numbers = #tpu.dot_dimension_numbers<[1], [0], [0], [1], [0, 0, 1, 1], [], []>} : vector<8x32xf32>, vector<32x128xf32>, vector<8x128xf32> -> vector<8x128xf32>
    %cst_4 = arith.constant 0.000000e+00 : f32
    %6 = vector.broadcast %cst_4 : f32 to vector<8x128xf32>
    %7 = arith.maximumf %5, %6 : vector<8x128xf32>
    %c0_5 = arith.constant 0 : index
    %c0_6 = arith.constant 0 : index
    %8 = vector.load %arg6[%c0_5, %c0_6] : memref<8x128xf32, #tpu.memory_space<vmem>>, vector<8x128xf32>
    %c0_7 = arith.constant 0 : index
    %c0_8 = arith.constant 0 : index
    %9 = vector.load %arg4[%c0_7, %c0_8] : memref<128x128xf32, #tpu.memory_space<vmem>>, vector<128x128xf32>
    %cst_9 = arith.constant dense<0.000000e+00> : vector<8x128xf32>
    %10 = tpu.matmul %7, %9, %cst_9 {dimension_numbers = #tpu.dot_dimension_numbers<[1], [0], [0], [1], [0, 0, 1, 1], [], []>} : vector<8x128xf32>, vector<128x128xf32>, vector<8x128xf32> -> vector<8x128xf32>
    %11 = arith.addf %8, %10 : vector<8x128xf32>
    %c0_10 = arith.constant 0 : index
    %c0_11 = arith.constant 0 : index
    %12 = vector.load %arg6[%c0_10, %c0_11] : memref<8x128xf32, #tpu.memory_space<vmem>>, vector<8x128xf32>
    tpu.vector_store %arg6[%c0_10, %c0_11], %11 {strides = array<i32>} : memref<8x128xf32, #tpu.memory_space<vmem>>, vector<8x128xf32>,
    %c0_i32_12 = arith.constant 0 : i32
    %13 = arith.cmpi eq, %arg1, %c0_i32_12 : i32
    %14 = arith.extui %13 : i1 to i32
    %c0_i32_13 = arith.constant 0 : i32
    %15 = arith.cmpi ne, %14, %c0_i32_13 : i32
    scf.if %15 {
      %c0_14 = arith.constant 0 : index
      %c0_15 = arith.constant 0 : index
      %16 = vector.load %arg6[%c0_14, %c0_15] : memref<8x128xf32, #tpu.memory_space<vmem>>, vector<8x128xf32>
      %c0_16 = arith.constant 0 : index
      %c0_17 = arith.constant 0 : index
      %17 = vector.load %arg5[%c0_16, %c0_17] : memref<8x128xf32, #tpu.memory_space<vmem>>, vector<8x128xf32>
      tpu.vector_store %arg5[%c0_16, %c0_17], %16 {strides = array<i32>} : memref<8x128xf32, #tpu.memory_space<vmem>>, vector<8x128xf32>,
    } else {
    }
    return
  }
  func.func @transform_0(%arg0: i32, %arg1: i32) -> (i32, i32) {
    %c0_i32 = arith.constant 0 : i32
    %c0_i32_0 = arith.constant 0 : i32
    return %arg0, %c0_i32 : i32, i32
  }
  func.func @transform_1(%arg0: i32, %arg1: i32) -> (i32, i32) {
    %c0_i32 = arith.constant 0 : i32
    %c0_i32_0 = arith.constant 0 : i32
    return %c0_i32, %arg1 : i32, i32
  }
  func.func @transform_2(%arg0: i32, %arg1: i32) -> (i32, i32) {
    %c0_i32 = arith.constant 0 : i32
    %c0_i32_0 = arith.constant 0 : i32
    return %arg1, %c0_i32 : i32, i32
  }
  func.func @transform_3(%arg0: i32, %arg1: i32) -> (i32, i32) {
    %c0_i32 = arith.constant 0 : i32
    %c0_i32_0 = arith.constant 0 : i32
    return %arg0, %c0_i32 : i32, i32
  }
}

</mosaic_0001>

<llo_original>
// kernel: tpu_custom_call.1
$region0: #{tpu_custom_call.1}
  #allocation0 [shape = 'u32[]', space=smem, size = 0x4, offset = 0x4, fixed_abs, tag = 'smem constant byte address 0x4 - core index']
  #allocation1 [shape = 'u32[144,128]{1,0:T(1,128)}', space=vmem, size = 0x12000, scoped, tag = 'internal scratch']
  #allocation2 [shape = 'f32[8,128]{1,0:T(8,128)}', space=vmem, size = 0x1000, scoped, tag = 'scratch operand']
  %s0 = inlined_call_operand.hbm [shape: f32[8,32], index: 0, kind: input, shape index: {}]
  %s1 = inlined_call_operand.hbm [shape: f32[32,128], index: 1, kind: input, shape index: {}]
  %s2 = inlined_call_operand.hbm [shape: f32[128,128], index: 2, kind: input, shape index: {}]
  %s3 = inlined_call_operand.hbm [shape: f32[8,128], index: 3, kind: output, shape index: {}]
  %s4 = sld [smem:[#allocation0]]
  $region42: #{tpu_custom_call.1} parent=0
    _
  %s6 = ssub.s32 1, %s4
  %s7 = scalar_select 0, %s6, %s4
  $region1: #{tpu_custom_call.1} parent=0
    #allocation3 [shape = 'u8[4096]{0}', space=vmem, size = 0x1000, scoped, tag = 'input window, operand 0, single buffered']
    #allocation4 [shape = 's32[1]{0}', space=sflag, size = 0x4, scoped, tag = 'scoped memory for tpu_custom_call.1']
    #allocation5 [shape = 's32[1]{0}', space=sflag, size = 0x4, scoped, tag = 'scoped memory for tpu_custom_call.1']
    #allocation6 [shape = 'u8[16384]{0}', space=vmem, size = 0x4000, scoped, tag = 'input window, operand 1, single buffered']
    #allocation7 [shape = 's32[1]{0}', space=sflag, size = 0x4, scoped, tag = 'scoped memory for tpu_custom_call.1']
    #allocation8 [shape = 'u8[65536]{0}', space=vmem, size = 0x10000, scoped, tag = 'input window, operand 2, single buffered']
    #allocation9 [shape = 'u8[4096]{0}', space=vmem, size = 0x1000, scoped, tag = 'output window, operand 0, single buffered']
    %8 = vsyncpa [#allocation4], 0
    %9 = vsyncpa [#allocation7], 0
    %10 = vsyncpa [#allocation5], 0
    // Predicated region
    $region2: #{tpu_custom_call.1} parent=1 // pred_check
      _
    $region3: #{tpu_custom_call.1} parent=1 // pred_check_branch
      %12 = sbr.rel (0) target = $region5
    $region4: #{tpu_custom_call.1} parent=1 // pred_region
      %s14 = ssub.s32 128, 128
      %15 = vsyncadd [#allocation4], %s14
      %s17 = sshll.u32 [#allocation3], 4
      %s18 = int_to_ptr.vmem [resolvable:$true] %s17
      %20 = dma.hbm_to_vmem [thread:$0]  %s0, 128, %s18, [#allocation4]
    $region5: #{tpu_custom_call.1} parent=1 // pred_fallthru
      _
    // Predicated region
    $region6: #{tpu_custom_call.1} parent=1 // pred_check
      _
    $region7: #{tpu_custom_call.1} parent=1 // pred_check_branch
      %22 = sbr.rel (0) target = $region9
    $region8: #{tpu_custom_call.1} parent=1 // pred_region
      %s24 = ssub.s32 512, 512
      %25 = vsyncadd [#allocation7], %s24
      %s26 = sshll.u32 [#allocation6], 4
      %s27 = int_to_ptr.vmem [resolvable:$true] %s26
      %32 = dma.hbm_to_vmem [thread:$0]  %s1, 512, %s27, [#allocation7], 128, 128, 8
    $region9: #{tpu_custom_call.1} parent=1 // pred_fallthru
      _
    // Predicated region
    $region10: #{tpu_custom_call.1} parent=1 // pred_check
      _
    $region11: #{tpu_custom_call.1} parent=1 // pred_check_branch
      %34 = sbr.rel (0) target = $region13
    $region12: #{tpu_custom_call.1} parent=1 // pred_region
      %s36 = ssub.s32 2048, 2048
      %37 = vsyncadd [#allocation7], %s36
      %s38 = sshll.u32 [#allocation8], 4
      %s39 = int_to_ptr.vmem [resolvable:$true] %s38
      %44 = dma.hbm_to_vmem [thread:$0]  %s2, 2048, %s39, [#allocation7], 128, 128, 8
    $region13: #{tpu_custom_call.1} parent=1 // pred_fallthru
      _
    // Predicated region
    $region14: #{tpu_custom_call.1} parent=1 // pred_check
      _
    $region15: #{tpu_custom_call.1} parent=1 // pred_check_branch
      %46 = sbr.rel (0) target = $region17
    $region16: #{tpu_custom_call.1} parent=1 // pred_region
      %47 = dma.done [#allocation4], 128
    $region17: #{tpu_custom_call.1} parent=1 // pred_fallthru
      _
    // Predicated region
    $region18: #{tpu_custom_call.1} parent=1 // pred_check
      _
    $region19: #{tpu_custom_call.1} parent=1 // pred_check_branch
      %49 = sbr.rel (0) target = $region21
    $region20: #{tpu_custom_call.1} parent=1 // pred_region
      %50 = dma.done [#allocation7], 512
    $region21: #{tpu_custom_call.1} parent=1 // pred_fallthru
      _
    // Predicated region
    $region22: #{tpu_custom_call.1} parent=1 // pred_check
      _
    $region23: #{tpu_custom_call.1} parent=1 // pred_check_branch
      %52 = sbr.rel (0) target = $region25
    $region24: #{tpu_custom_call.1} parent=1 // pred_region
      %53 = dma.done [#allocation7], 2048
    $region25: #{tpu_custom_call.1} parent=1 // pred_fallthru
      _
    %p54 = scmp.eq.s32.totalorder 0, 0
    // Predicated region
    $region26: #{tpu_custom_call.1} parent=1 // pred_check
      %p55 = pneg %p54
    $region27: #{tpu_custom_call.1} parent=1 // pred_check_branch
      %57 = sbr.rel (%p55) target = $region29
    $region28: #{tpu_custom_call.1} parent=1 // pred_region
      %58 = vst [vmem:[#allocation2] sm:$0xff] 0.0
    $region29: #{tpu_custom_call.1} parent=1 // pred_fallthru
      _
    %v59 = vld [vmem:[#allocation3] sm:$0xff]
    %v60 = vld [vmem:[#allocation6] sm:$0xff]
    %v61 = vld [vmem:[#allocation6 + $0x8] sm:$0xff]
    %v62 = vld [vmem:[#allocation6 + $0x10] sm:$0xff]
    %v63 = vld [vmem:[#allocation6 + $0x18] sm:$0xff]
    %vm64 = vcmask 261120
    %v66 = vsel %vm64, %v59, 0
    %68 = vmatprep.subr.mxu0 0.0
    %69 = vmatpush1.msra.mxu0 %v60
    %70 = vmatprep.subr.mxu0 0.0
    %71 = vmatpush1.msra.mxu0 %v61
    %72 = vmatprep.subr.mxu0 0.0
    %73 = vmatpush1.msra.mxu0 %v62
    %74 = vmatprep.subr.mxu0 0.0
    %75 = vmatpush1.msra.mxu0 %v63
    %76 = vmatprep.subr.mxu0 0.0
    %77 = vmatpush1.msra.mxu0 0.0
    %78 = vmatprep.subr.mxu0 0.0
    %79 = vmatpush1.msra.mxu0 0.0
    %80 = vmatprep.subr.mxu0 0.0
    %81 = vmatpush1.msra.mxu0 0.0
    %82 = vmatprep.subr.mxu0 0.0
    %83 = vmatpush1.msra.mxu0 0.0
    %84 = vmatprep.subr.mxu0 0.0
    %85 = vmatpush1.msra.mxu0 0.0
    %86 = vmatprep.subr.mxu0 0.0
    %87 = vmatpush1.msra.mxu0 0.0
    %88 = vmatprep.subr.mxu0 0.0
    %89 = vmatpush1.msra.mxu0 0.0
    %90 = vmatprep.subr.mxu0 0.0
    %91 = vmatpush1.msra.mxu0 0.0
    %92 = vmatprep.subr.mxu0 0.0
    %93 = vmatpush1.msra.mxu0 0.0
    %94 = vmatprep.subr.mxu0 0.0
    %95 = vmatpush1.msra.mxu0 0.0
    %96 = vmatprep.subr.mxu0 0.0
    %97 = vmatpush1.msra.mxu0 0.0
    %98 = vmatprep.subr.mxu0 0.0
    %99 = vmatpush1.msra.mxu0 0.0
    %100 = vmatprep.subr.mxu0 0.0
    %101 = vmatpush1.msra.mxu0 0.0
    %102 = vmatprep.subr.mxu0 0.0
    %103 = vmatpush1.msra.mxu0 0.0
    %104 = vmatprep.subr.mxu0 0.0
    %105 = vmatpush1.msra.mxu0 0.0
    %106 = vmatprep.subr.mxu0 0.0
    %107 = vmatpush1.msra.mxu0 0.0
    %108 = vmatprep.subr.mxu0 0.0
    %109 = vmatpush1.msra.mxu0 0.0
    %110 = vmatprep.subr.mxu0 0.0
    %111 = vmatpush1.msra.mxu0 0.0
    %112 = vmatprep.subr.mxu0 0.0
    %113 = vmatpush1.msra.mxu0 0.0
    %114 = vmatprep.subr.mxu0 0.0
    %115 = vmatpush1.msra.mxu0 0.0
    %116 = vmatprep.subr.mxu0 0.0
    %117 = vmatpush1.msra.mxu0 0.0
    %118 = vmatprep.subr.mxu0 0.0
    %119 = vmatpush1.msra.mxu0 0.0
    %120 = vmatprep.subr.mxu0 0.0
    %121 = vmatpush1.msra.mxu0 0.0
    %122 = vmatprep.subr.mxu0 0.0
    %123 = vmatpush1.msra.mxu0 0.0
    %124 = vmatprep.subr.mxu0 0.0
    %125 = vmatpush1.msra.mxu0 0.0
    %126 = vmatprep.subr.mxu0 0.0
    %127 = vmatpush1.msra.mxu0 0.0
    %128 = vmatprep.subr.mxu0 0.0
    %129 = vmatpush1.msra.mxu0 0.0
    %130 = vmatprep.subr.mxu0 0.0
    %131 = vmatpush1.msra.mxu0 0.0
    %132 = vmatprep.mubr.f32.mxu0 0.0
    %133 = vmatmul.mubr.f32.gmra.mrb[0].mxu0 %v66
    %v134 = vpop.f32.mrb[0].mxu0
    %v135 = vadd.f32 0.0, %v134
    %v136 = vpop.f32.mrb[0].mxu0
    %137 = vdwg.mxu0
    %v138 = vmax.f32 %v135, 0.0
    %v139 = vld [vmem:[#allocation2] sm:$0xff]
    %v140 = vld [vmem:[#allocation8] sm:$0xff]
    %v141 = vld [vmem:[#allocation8 + $0x8] sm:$0xff]
    %v142 = vld [vmem:[#allocation8 + $0x10] sm:$0xff]
    %v143 = vld [vmem:[#allocation8 + $0x18] sm:$0xff]
    %v144 = vld [vmem:[#allocation8 + $0x20] sm:$0xff]
    %v145 = vld [vmem:[#allocation8 + $0x28] sm:$0xff]
    %v146 = vld [vmem:[#allocation8 + $0x30] sm:$0xff]
    %v147 = vld [vmem:[#allocation8 + $0x38] sm:$0xff]
    %v148 = vld [vmem:[#allocation8 + $0x40] sm:$0xff]
    %v149 = vld [vmem:[#allocation8 + $0x48] sm:$0xff]
    %v150 = vld [vmem:[#allocation8 + $0x50] sm:$0xff]
    %v151 = vld [vmem:[#allocation8 + $0x58] sm:$0xff]
    %v152 = vld [vmem:[#allocation8 + $0x60] sm:$0xff]
    %v153 = vld [vmem:[#allocation8 + $0x68] sm:$0xff]
    %v154 = vld [vmem:[#allocation8 + $0x70] sm:$0xff]
    %v155 = vld [vmem:[#allocation8 + $0x78] sm:$0xff]
    %156 = vmatprep.subr.mxu0 0.0
    %157 = vmatpush1.msra.mxu0 %v140
    %158 = vmatprep.subr.mxu0 0.0
    %159 = vmatpush1.msra.mxu0 %v141
    %160 = vmatprep.subr.mxu0 0.0
    %161 = vmatpush1.msra.mxu0 %v142
    %162 = vmatprep.subr.mxu0 0.0
    %163 = vmatpush1.msra.mxu0 %v143
    %164 = vmatprep.subr.mxu0 0.0
    %165 = vmatpush1.msra.mxu0 %v144
    %166 = vmatprep.subr.mxu0 0.0
    %167 = vmatpush1.msra.mxu0 %v145
    %168 = vmatprep.subr.mxu0 0.0
    %169 = vmatpush1.msra.mxu0 %v146
    %170 = vmatprep.subr.mxu0 0.0
    %171 = vmatpush1.msra.mxu0 %v147
    %172 = vmatprep.subr.mxu0 0.0
    %173 = vmatpush1.msra.mxu0 %v148
    %174 = vmatprep.subr.mxu0 0.0
    %175 = vmatpush1.msra.mxu0 %v149
    %176 = vmatprep.subr.mxu0 0.0
    %177 = vmatpush1.msra.mxu0 %v150
    %178 = vmatprep.subr.mxu0 0.0
    %179 = vmatpush1.msra.mxu0 %v151
    %180 = vmatprep.subr.mxu0 0.0
    %181 = vmatpush1.msra.mxu0 %v152
    %182 = vmatprep.subr.mxu0 0.0
    %183 = vmatpush1.msra.mxu0 %v153
    %184 = vmatprep.subr.mxu0 0.0
    %185 = vmatpush1.msra.mxu0 %v154
    %186 = vmatprep.subr.mxu0 0.0
    %187 = vmatpush1.msra.mxu0 %v155
    %188 = vmatprep.subr.mxu0 0.0
    %189 = vmatpush1.msra.mxu0 0.0
    %190 = vmatprep.subr.mxu0 0.0
    %191 = vmatpush1.msra.mxu0 0.0
    %192 = vmatprep.subr.mxu0 0.0
    %193 = vmatpush1.msra.mxu0 0.0
    %194 = vmatprep.subr.mxu0 0.0
    %195 = vmatpush1.msra.mxu0 0.0
    %196 = vmatprep.subr.mxu0 0.0
    %197 = vmatpush1.msra.mxu0 0.0
    %198 = vmatprep.subr.mxu0 0.0
    %199 = vmatpush1.msra.mxu0 0.0
    %200 = vmatprep.subr.mxu0 0.0
    %201 = vmatpush1.msra.mxu0 0.0
    %202 = vmatprep.subr.mxu0 0.0
    %203 = vmatpush1.msra.mxu0 0.0
    %204 = vmatprep.subr.mxu0 0.0
    %205 = vmatpush1.msra.mxu0 0.0
    %206 = vmatprep.subr.mxu0 0.0
    %207 = vmatpush1.msra.mxu0 0.0
    %208 = vmatprep.subr.mxu0 0.0
    %209 = vmatpush1.msra.mxu0 0.0
    %210 = vmatprep.subr.mxu0 0.0
    %211 = vmatpush1.msra.mxu0 0.0
    %212 = vmatprep.subr.mxu0 0.0
    %213 = vmatpush1.msra.mxu0 0.0
    %214 = vmatprep.subr.mxu0 0.0
    %215 = vmatpush1.msra.mxu0 0.0
    %216 = vmatprep.subr.mxu0 0.0
    %217 = vmatpush1.msra.mxu0 0.0
    %218 = vmatprep.subr.mxu0 0.0
    %219 = vmatpush1.msra.mxu0 0.0
    %220 = vmatprep.mubr.f32.mxu0 0.0
    %221 = vmatmul.mubr.f32.gmra.mrb[0].mxu0 %v138
    %v222 = vpop.f32.mrb[0].mxu0
    %v223 = vadd.f32 0.0, %v222
    %v224 = vpop.f32.mrb[0].mxu0
    %225 = vdwg.mxu0
    %v226 = vadd.f32 %v139, %v223
    %227 = vst [vmem:[#allocation2] sm:$0xff] %v226
    // Predicated region
    $region30: #{tpu_custom_call.1} parent=1 // pred_check
      %p228 = pneg %p54
    $region31: #{tpu_custom_call.1} parent=1 // pred_check_branch
      %230 = sbr.rel (%p228) target = $region33
    $region32: #{tpu_custom_call.1} parent=1 // pred_region
      %v231 = vld [vmem:[#allocation2] sm:$0xff]
      %232 = vst [vmem:[#allocation9] sm:$0xff] %v231
    $region33: #{tpu_custom_call.1} parent=1 // pred_fallthru
      _
    // Predicated region
    $region34: #{tpu_custom_call.1} parent=1 // pred_check
      _
    $region35: #{tpu_custom_call.1} parent=1 // pred_check_branch
      %234 = sbr.rel (0) target = $region37
    $region36: #{tpu_custom_call.1} parent=1 // pred_region
      %s236 = ssub.s32 128, 128
      %237 = vsyncadd [#allocation5], %s236
      %s239 = sshll.u32 [#allocation9], 4
      %s240 = int_to_ptr.vmem [resolvable:$true] %s239
      %242 = dma.vmem_to_hbm [thread:$0]  %s240, 128, %s3, [#allocation5]
    $region37: #{tpu_custom_call.1} parent=1 // pred_fallthru
      _
    // Predicated region
    $region38: #{tpu_custom_call.1} parent=1 // pred_check
      _
    $region39: #{tpu_custom_call.1} parent=1 // pred_check_branch
      %244 = sbr.rel (0) target = $region41
    $region40: #{tpu_custom_call.1} parent=1 // pred_region
      %245 = dma.done [#allocation5], 128
    $region41: #{tpu_custom_call.1} parent=1 // pred_fallthru
      _
    %246 = vsyncpa [#allocation4], 1
    %247 = vsyncpa [#allocation7], 1
    %248 = vsyncpa [#allocation5], 1

// kernel: tpu_custom_call.1
$region0: #{tpu_custom_call.1}
  #allocation0 [shape = 'u32[]', space=smem, size = 0x4, offset = 0x4, fixed_abs, tag = 'smem constant byte address 0x4 - core index']
  #allocation1 [shape = 'u32[144,128]{1,0:T(1,128)}', space=vmem, size = 0x12000, scoped, tag = 'internal scratch']
  #allocation2 [shape = 'f32[8,128]{1,0:T(8,128)}', space=vmem, size = 0x1000, scoped, tag = 'scratch operand']
  %s0 = inlined_call_operand.hbm [shape: f32[8,32], index: 0, kind: input, shape index: {}]
  %s1 = inlined_call_operand.hbm [shape: f32[32,128], index: 1, kind: input, shape index: {}]
  %s2 = inlined_call_operand.hbm [shape: f32[128,128], index: 2, kind: input, shape index: {}]
  %s3 = inlined_call_operand.hbm [shape: f32[8,128], index: 3, kind: output, shape index: {}]
  %s4 = sld [smem:[#allocation0]]
  $region42: #{tpu_custom_call.1} parent=0
    _
  %s6 = ssub.s32 1, %s4
  %s7 = scalar_select 0, %s6, %s4
  $region1: #{tpu_custom_call.1} parent=0
    #allocation3 [shape = 'u8[4096]{0}', space=vmem, size = 0x1000, scoped, tag = 'input window, operand 0, single buffered']
    #allocation4 [shape = 's32[1]{0}', space=sflag, size = 0x4, scoped, tag = 'scoped memory for tpu_custom_call.1']
    #allocation5 [shape = 's32[1]{0}', space=sflag, size = 0x4, scoped, tag = 'scoped memory for tpu_custom_call.1']
    #allocation6 [shape = 'u8[16384]{0}', space=vmem, size = 0x4000, scoped, tag = 'input window, operand 1, single buffered']
    #allocation7 [shape = 's32[1]{0}', space=sflag, size = 0x4, scoped, tag = 'scoped memory for tpu_custom_call.1']
    #allocation8 [shape = 'u8[65536]{0}', space=vmem, size = 0x10000, scoped, tag = 'input window, operand 2, single buffered']
    #allocation9 [shape = 'u8[4096]{0}', space=vmem, size = 0x1000, scoped, tag = 'output window, operand 0, single buffered']
    %8 = vsyncpa [#allocation4], 0
    %9 = vsyncpa [#allocation7], 0
    %10 = vsyncpa [#allocation5], 0
    // Predicated region
    $region2: #{tpu_custom_call.1} parent=1 // pred_check
      _
    $region3: #{tpu_custom_call.1} parent=1 // pred_check_branch
      %12 = sbr.rel (0) target = $region5
    $region4: #{tpu_custom_call.1} parent=1 // pred_region
      %s14 = ssub.s32 128, 128
      %15 = vsyncadd [#allocation4], %s14
      %s17 = sshll.u32 [#allocation3], 4
      %s18 = int_to_ptr.vmem [resolvable:$true] %s17
      %20 = dma.hbm_to_vmem [thread:$0]  %s0, 128, %s18, [#allocation4]
    $region5: #{tpu_custom_call.1} parent=1 // pred_fallthru
      _
    // Predicated region
    $region6: #{tpu_custom_call.1} parent=1 // pred_check
      _
    $region7: #{tpu_custom_call.1} parent=1 // pred_check_branch
      %22 = sbr.rel (0) target = $region9
    $region8: #{tpu_custom_call.1} parent=1 // pred_region
      %s24 = ssub.s32 512, 512
      %25 = vsyncadd [#allocation7], %s24
      %s26 = sshll.u32 [#allocation6], 4
      %s27 = int_to_ptr.vmem [resolvable:$true] %s26
      %32 = dma.hbm_to_vmem [thread:$0]  %s1, 512, %s27, [#allocation7], 128, 128, 8
    $region9: #{tpu_custom_call.1} parent=1 // pred_fallthru
      _
    // Predicated region
    $region10: #{tpu_custom_call.1} parent=1 // pred_check
      _
    $region11: #{tpu_custom_call.1} parent=1 // pred_check_branch
      %34 = sbr.rel (0) target = $region13
    $region12: #{tpu_custom_call.1} parent=1 // pred_region
      %s36 = ssub.s32 2048, 2048
      %37 = vsyncadd [#allocation7], %s36
      %s38 = sshll.u32 [#allocation8], 4
      %s39 = int_to_ptr.vmem [resolvable:$true] %s38
      %44 = dma.hbm_to_vmem [thread:$0]  %s2, 2048, %s39, [#allocation7], 128, 128, 8
    $region13: #{tpu_custom_call.1} parent=1 // pred_fallthru
      _
    // Predicated region
    $region14: #{tpu_custom_call.1} parent=1 // pred_check
      _
    $region15: #{tpu_custom_call.1} parent=1 // pred_check_branch
      %46 = sbr.rel (0) target = $region17
    $region16: #{tpu_custom_call.1} parent=1 // pred_region
      %47 = dma.done [#allocation4], 128
    $region17: #{tpu_custom_call.1} parent=1 // pred_fallthru
      _
    // Predicated region
    $region18: #{tpu_custom_call.1} parent=1 // pred_check
      _
    $region19: #{tpu_custom_call.1} parent=1 // pred_check_branch
      %49 = sbr.rel (0) target = $region21
    $region20: #{tpu_custom_call.1} parent=1 // pred_region
      %50 = dma.done [#allocation7], 512
    $region21: #{tpu_custom_call.1} parent=1 // pred_fallthru
      _
    // Predicated region
    $region22: #{tpu_custom_call.1} parent=1 // pred_check
      _
    $region23: #{tpu_custom_call.1} parent=1 // pred_check_branch
      %52 = sbr.rel (0) target = $region25
    $region24: #{tpu_custom_call.1} parent=1 // pred_region
      %53 = dma.done [#allocation7], 2048
    $region25: #{tpu_custom_call.1} parent=1 // pred_fallthru
      _
    %p54 = scmp.eq.s32.totalorder 0, 0
    // Predicated region
    $region26: #{tpu_custom_call.1} parent=1 // pred_check
      %p55 = pneg %p54
    $region27: #{tpu_custom_call.1} parent=1 // pred_check_branch
      %57 = sbr.rel (%p55) target = $region29
    $region28: #{tpu_custom_call.1} parent=1 // pred_region
      %58 = vst [vmem:[#allocation2] sm:$0xff] 0.0
    $region29: #{tpu_custom_call.1} parent=1 // pred_fallthru
      _
    %v59 = vld [vmem:[#allocation3] sm:$0xff]
    %v60 = vld [vmem:[#allocation6] sm:$0xff]
    %v61 = vld [vmem:[#allocation6 + $0x8] sm:$0xff]
    %v62 = vld [vmem:[#allocation6 + $0x10] sm:$0xff]
    %v63 = vld [vmem:[#allocation6 + $0x18] sm:$0xff]
    %vm64 = vcmask 261120
    %v66 = vsel %vm64, %v59, 0
    %68 = vmatprep.subr.mxu0 0.0
    %69 = vmatpush1.msra.mxu0 %v60
    %70 = vmatprep.subr.mxu0 0.0
    %71 = vmatpush1.msra.mxu0 %v61
    %72 = vmatprep.subr.mxu0 0.0
    %73 = vmatpush1.msra.mxu0 %v62
    %74 = vmatprep.subr.mxu0 0.0
    %75 = vmatpush1.msra.mxu0 %v63
    %76 = vmatprep.subr.mxu0 0.0
    %77 = vmatpush1.msra.mxu0 0.0
    %78 = vmatprep.subr.mxu0 0.0
    %79 = vmatpush1.msra.mxu0 0.0
    %80 = vmatprep.subr.mxu0 0.0
    %81 = vmatpush1.msra.mxu0 0.0
    %82 = vmatprep.subr.mxu0 0.0
    %83 = vmatpush1.msra.mxu0 0.0
    %84 = vmatprep.subr.mxu0 0.0
    %85 = vmatpush1.msra.mxu0 0.0
    %86 = vmatprep.subr.mxu0 0.0
    %87 = vmatpush1.msra.mxu0 0.0
    %88 = vmatprep.subr.mxu0 0.0
    %89 = vmatpush1.msra.mxu0 0.0
    %90 = vmatprep.subr.mxu0 0.0
    %91 = vmatpush1.msra.mxu0 0.0
    %92 = vmatprep.subr.mxu0 0.0
    %93 = vmatpush1.msra.mxu0 0.0
    %94 = vmatprep.subr.mxu0 0.0
    %95 = vmatpush1.msra.mxu0 0.0
    %96 = vmatprep.subr.mxu0 0.0
    %97 = vmatpush1.msra.mxu0 0.0
    %98 = vmatprep.subr.mxu0 0.0
    %99 = vmatpush1.msra.mxu0 0.0
    %100 = vmatprep.subr.mxu0 0.0
    %101 = vmatpush1.msra.mxu0 0.0
    %102 = vmatprep.subr.mxu0 0.0
    %103 = vmatpush1.msra.mxu0 0.0
    %104 = vmatprep.subr.mxu0 0.0
    %105 = vmatpush1.msra.mxu0 0.0
    %106 = vmatprep.subr.mxu0 0.0
    %107 = vmatpush1.msra.mxu0 0.0
    %108 = vmatprep.subr.mxu0 0.0
    %109 = vmatpush1.msra.mxu0 0.0
    %110 = vmatprep.subr.mxu0 0.0
    %111 = vmatpush1.msra.mxu0 0.0
    %112 = vmatprep.subr.mxu0 0.0
    %113 = vmatpush1.msra.mxu0 0.0
    %114 = vmatprep.subr.mxu0 0.0
    %115 = vmatpush1.msra.mxu0 0.0
    %116 = vmatprep.subr.mxu0 0.0
    %117 = vmatpush1.msra.mxu0 0.0
    %118 = vmatprep.subr.mxu0 0.0
    %119 = vmatpush1.msra.mxu0 0.0
    %120 = vmatprep.subr.mxu0 0.0
    %121 = vmatpush1.msra.mxu0 0.0
    %122 = vmatprep.subr.mxu0 0.0
    %123 = vmatpush1.msra.mxu0 0.0
    %124 = vmatprep.subr.mxu0 0.0
    %125 = vmatpush1.msra.mxu0 0.0
    %126 = vmatprep.subr.mxu0 0.0
    %127 = vmatpush1.msra.mxu0 0.0
    %128 = vmatprep.subr.mxu0 0.0
    %129 = vmatpush1.msra.mxu0 0.0
    %130 = vmatprep.subr.mxu0 0.0
    %131 = vmatpush1.msra.mxu0 0.0
    %132 = vmatprep.mubr.f32.mxu0 0.0
    %133 = vmatmul.mubr.f32.gmra.mrb[0].mxu0 %v66
    %v134 = vpop.f32.mrb[0].mxu0
    %v135 = vadd.f32 0.0, %v134
    %v136 = vpop.f32.mrb[0].mxu0
    %137 = vdwg.mxu0
    %v138 = vmax.f32 %v135, 0.0
    %v139 = vld [vmem:[#allocation2] sm:$0xff]
    %v140 = vld [vmem:[#allocation8] sm:$0xff]
    %v141 = vld [vmem:[#allocation8 + $0x8] sm:$0xff]
    %v142 = vld [vmem:[#allocation8 + $0x10] sm:$0xff]
    %v143 = vld [vmem:[#allocation8 + $0x18] sm:$0xff]
    %v144 = vld [vmem:[#allocation8 + $0x20] sm:$0xff]
    %v145 = vld [vmem:[#allocation8 + $0x28] sm:$0xff]
    %v146 = vld [vmem:[#allocation8 + $0x30] sm:$0xff]
    %v147 = vld [vmem:[#allocation8 + $0x38] sm:$0xff]
    %v148 = vld [vmem:[#allocation8 + $0x40] sm:$0xff]
    %v149 = vld [vmem:[#allocation8 + $0x48] sm:$0xff]
    %v150 = vld [vmem:[#allocation8 + $0x50] sm:$0xff]
    %v151 = vld [vmem:[#allocation8 + $0x58] sm:$0xff]
    %v152 = vld [vmem:[#allocation8 + $0x60] sm:$0xff]
    %v153 = vld [vmem:[#allocation8 + $0x68] sm:$0xff]
    %v154 = vld [vmem:[#allocation8 + $0x70] sm:$0xff]
    %v155 = vld [vmem:[#allocation8 + $0x78] sm:$0xff]
    %156 = vmatprep.subr.mxu0 0.0
    %157 = vmatpush1.msra.mxu0 %v140
    %158 = vmatprep.subr.mxu0 0.0
    %159 = vmatpush1.msra.mxu0 %v141
    %160 = vmatprep.subr.mxu0 0.0
    %161 = vmatpush1.msra.mxu0 %v142
    %162 = vmatprep.subr.mxu0 0.0
    %163 = vmatpush1.msra.mxu0 %v143
    %164 = vmatprep.subr.mxu0 0.0
    %165 = vmatpush1.msra.mxu0 %v144
    %166 = vmatprep.subr.mxu0 0.0
    %167 = vmatpush1.msra.mxu0 %v145
    %168 = vmatprep.subr.mxu0 0.0
    %169 = vmatpush1.msra.mxu0 %v146
    %170 = vmatprep.subr.mxu0 0.0
    %171 = vmatpush1.msra.mxu0 %v147
    %172 = vmatprep.subr.mxu0 0.0
    %173 = vmatpush1.msra.mxu0 %v148
    %174 = vmatprep.subr.mxu0 0.0
    %175 = vmatpush1.msra.mxu0 %v149
    %176 = vmatprep.subr.mxu0 0.0
    %177 = vmatpush1.msra.mxu0 %v150
    %178 = vmatprep.subr.mxu0 0.0
    %179 = vmatpush1.msra.mxu0 %v151
    %180 = vmatprep.subr.mxu0 0.0
    %181 = vmatpush1.msra.mxu0 %v152
    %182 = vmatprep.subr.mxu0 0.0
    %183 = vmatpush1.msra.mxu0 %v153
    %184 = vmatprep.subr.mxu0 0.0
    %185 = vmatpush1.msra.mxu0 %v154
    %186 = vmatprep.subr.mxu0 0.0
    %187 = vmatpush1.msra.mxu0 %v155
    %188 = vmatprep.subr.mxu0 0.0
    %189 = vmatpush1.msra.mxu0 0.0
    %190 = vmatprep.subr.mxu0 0.0
    %191 = vmatpush1.msra.mxu0 0.0
    %192 = vmatprep.subr.mxu0 0.0
    %193 = vmatpush1.msra.mxu0 0.0
    %194 = vmatprep.subr.mxu0 0.0
    %195 = vmatpush1.msra.mxu0 0.0
    %196 = vmatprep.subr.mxu0 0.0
    %197 = vmatpush1.msra.mxu0 0.0
    %198 = vmatprep.subr.mxu0 0.0
    %199 = vmatpush1.msra.mxu0 0.0
    %200 = vmatprep.subr.mxu0 0.0
    %201 = vmatpush1.msra.mxu0 0.0
    %202 = vmatprep.subr.mxu0 0.0
    %203 = vmatpush1.msra.mxu0 0.0
    %204 = vmatprep.subr.mxu0 0.0
    %205 = vmatpush1.msra.mxu0 0.0
    %206 = vmatprep.subr.mxu0 0.0
    %207 = vmatpush1.msra.mxu0 0.0
    %208 = vmatprep.subr.mxu0 0.0
    %209 = vmatpush1.msra.mxu0 0.0
    %210 = vmatprep.subr.mxu0 0.0
    %211 = vmatpush1.msra.mxu0 0.0
    %212 = vmatprep.subr.mxu0 0.0
    %213 = vmatpush1.msra.mxu0 0.0
    %214 = vmatprep.subr.mxu0 0.0
    %215 = vmatpush1.msra.mxu0 0.0
    %216 = vmatprep.subr.mxu0 0.0
    %217 = vmatpush1.msra.mxu0 0.0
    %218 = vmatprep.subr.mxu0 0.0
    %219 = vmatpush1.msra.mxu0 0.0
    %220 = vmatprep.mubr.f32.mxu0 0.0
    %221 = vmatmul.mubr.f32.gmra.mrb[0].mxu0 %v138
    %v222 = vpop.f32.mrb[0].mxu0
    %v223 = vadd.f32 0.0, %v222
    %v224 = vpop.f32.mrb[0].mxu0
    %225 = vdwg.mxu0
    %v226 = vadd.f32 %v139, %v223
    %227 = vst [vmem:[#allocation2] sm:$0xff] %v226
    // Predicated region
    $region30: #{tpu_custom_call.1} parent=1 // pred_check
      %p228 = pneg %p54
    $region31: #{tpu_custom_call.1} parent=1 // pred_check_branch
      %230 = sbr.rel (%p228) target = $region33
    $region32: #{tpu_custom_call.1} parent=1 // pred_region
      %v231 = vld [vmem:[#allocation2] sm:$0xff]
      %232 = vst [vmem:[#allocation9] sm:$0xff] %v231
    $region33: #{tpu_custom_call.1} parent=1 // pred_fallthru
      _
    // Predicated region
    $region34: #{tpu_custom_call.1} parent=1 // pred_check
      _
    $region35: #{tpu_custom_call.1} parent=1 // pred_check_branch
      %234 = sbr.rel (0) target = $region37
    $region36: #{tpu_custom_call.1} parent=1 // pred_region
      %s236 = ssub.s32 128, 128
      %237 = vsyncadd [#allocation5], %s236
      %s239 = sshll.u32 [#allocation9], 4
      %s240 = int_to_ptr.vmem [resolvable:$true] %s239
      %242 = dma.vmem_to_hbm [thread:$0]  %s240, 128, %s3, [#allocation5]
    $region37: #{tpu_custom_call.1} parent=1 // pred_fallthru
      _
    // Predicated region
    $region38: #{tpu_custom_call.1} parent=1 // pred_check
      _
    $region39: #{tpu_custom_call.1} parent=1 // pred_check_branch
      %244 = sbr.rel (0) target = $region41
    $region40: #{tpu_custom_call.1} parent=1 // pred_region
      %245 = dma.done [#allocation5], 128
    $region41: #{tpu_custom_call.1} parent=1 // pred_fallthru
      _
    %246 = vsyncpa [#allocation4], 1
    %247 = vsyncpa [#allocation7], 1
    %248 = vsyncpa [#allocation5], 1

</llo_original>
